<compile_context>
chip_gen: v7x
topology: tpu7x:2x2x1
jax: 0.10.0
libtpu: 0.0.40
codegen_flags: <defaults>
</compile_context>

<pallas_src>
import functools

import jax
import jax.numpy as jnp
from jax.experimental import pallas as pl
from jax.experimental.pallas import tpu as pltpu

SMOOTH = 1e-05
_ACC_LANES = 128


def _lane_fold(v):
    """(R, T) -> (R, 128): pairwise-halving tree of full-vreg VPU adds.
    T is a power-of-two multiple of 128 by construction of the tile."""
    t = v.shape[-1]
    while t > _ACC_LANES:
        t //= 2
        v = v[:, :t] + v[:, t:]
    return v


def _dice_focal_kernel(x_ref, t_ref, inter_ref, z_ref, y_ref, fl_ref, *,
                       num_classes, hw, tile, gamma, alpha, masked):
    i = pl.program_id(1)

    # Per-batch accumulators live in the output blocks (same block revisited
    # across the inner pixel-tile axis): init on the first tile of each batch.
    @pl.when(i == 0)
    def _():
        inter_ref[...] = jnp.zeros_like(inter_ref)
        z_ref[...] = jnp.zeros_like(z_ref)
        y_ref[...] = jnp.zeros_like(y_ref)
        fl_ref[...] = jnp.zeros_like(fl_ref)

    x = x_ref[...].astype(jnp.float32)          # (C, T) logits
    t = t_ref[...].astype(jnp.int32)            # (1, T) labels (native dtype in HBM)

    if masked:                                  # static: only compiled when HW % tile != 0
        lane = jax.lax.broadcasted_iota(jnp.int32, (1, tile), 1)
        valid = (i * tile + lane) < hw          # (1, T) bool
        x = jnp.where(valid, x, 0.0)            # sanitize OOB garbage before exp
        t = jnp.where(valid, t, -1)             # -1 never matches a class
        vmask = valid.astype(jnp.float32)

    cls = jax.lax.broadcasted_iota(jnp.int32, (num_classes, tile), 0)
    oh = (t == cls).astype(jnp.float32)         # (C, T) one-hot (0 on padding)

    # numerically stable softmax over the class (sublane) axis
    mx = jnp.max(x, axis=0, keepdims=True)      # (1, T)
    e = jnp.exp(x - mx)                         # (C, T)
    s = jnp.sum(e, axis=0, keepdims=True)       # (1, T)
    # Exact reciprocal kept so the 1e-4 verification tolerance holds;
    # pl.reciprocal(s, approx=True) is a free EUP slot if tolerance allows.
    p = e * pl.reciprocal(s, approx=False)      # (C, T) softmax probabilities

    poh = p * oh                                # reused for dice AND focal p_t
    pp = p * p
    if masked:
        pp = pp * vmask                         # p is 1/C on padded pixels

    # focal: -(1 - p_t)^gamma * log(p_t) at the target class; p_t reuses
    # p*onehot (no extra exp), log(p_t) = x_t - logsumexp.
    p_t = jnp.sum(poh, axis=0, keepdims=True)          # (1, T)
    x_tgt = jnp.sum(x * oh, axis=0, keepdims=True)     # (1, T)
    lp_t = x_tgt - (mx + jnp.log(s))                   # finite even on padding
    if float(gamma) == 2.0:
        mod = (1.0 - p_t) * (1.0 - p_t)
    else:
        mod = jnp.power(1.0 - p_t, gamma)
    fl_pix = -mod * lp_t                               # (1, T)
    if alpha is not None:
        fl_pix = fl_pix * jnp.where(t == 0, 1.0 - alpha, alpha)
    if masked:
        fl_pix = fl_pix * vmask

    # Lane-dense accumulation: fold T -> 128 with full-vreg VPU adds and add
    # into the (C, 128)/(1, 128) per-batch output blocks (no per-step XLU
    # cross-lane reduce, no 1-lane masked stores).
    inter_ref[...] += _lane_fold(poh)
    z_ref[...] += _lane_fold(pp)
    y_ref[...] += _lane_fold(oh)
    fl_ref[...] += _lane_fold(fl_pix)


def _vmem_capacity_bytes():
    """Generation-aware VMEM capacity (v5e/v6e: 128 MiB, v7x: 64 MiB)."""
    try:
        info = pltpu.get_tpu_info()
        cap = int(getattr(info, "vmem_capacity_bytes", 0))
        if cap > 0:
            return cap
    except Exception:
        pass
    return 64 * 1024 * 1024   # conservative fallback (v7x physical size)


def _pick_tile(num_classes, hw, vmem_budget, max_tile=65536):
    """Largest power-of-two multiple of 128 lanes fitting the VMEM budget
    (double-buffered logits + labels blocks + ~6 live f32 (C, tile) temps),
    preferring a tile that divides HW exactly (hot path with no mask ops)."""
    per_lane = (2 * num_classes + 6 * num_classes) * 4 + 2 * 4 + 48
    cap = max(128, min(int(vmem_budget // per_lane), max_tile))
    cap128 = 128
    while cap128 * 2 <= cap:
        cap128 *= 2                         # largest 128 * 2^m <= cap
    if hw <= cap128:                        # one tile per image row
        t = 128
        while t < hw:
            t *= 2
        return t
    t = cap128                              # prefer an exact divisor of HW ...
    while t > 128 and hw % t:
        t //= 2
    if hw % t == 0 and t * 2 >= cap128:     # ... unless it costs >2x tile size
        return t
    return cap128                           # masked remainder path


def dice_focal_loss(logits_nchw, target_b1hw, fl_weight=1.0, dc_weight=1.0,
                    gamma=2.0, alpha=None, tile=None):
    """logits_nchw: [B, C, H, W] float; target_b1hw: [B, 1, H, W] integer."""
    b, c, h, w = logits_nchw.shape
    hw = h * w

    # Free reshapes only -- no transpose / pad / dtype-cast HBM passes.
    x = logits_nchw.reshape(b, c, hw)
    t = target_b1hw.reshape(b, 1, hw)
    if not jnp.issubdtype(t.dtype, jnp.integer):
        t = t.astype(jnp.int32)             # only if labels are not integer-typed

    vmem_cap = _vmem_capacity_bytes()
    if tile is None:
        tile = _pick_tile(c, hw, vmem_budget=int(vmem_cap * 0.4))
    else:
        req = max(128, int(tile))
        tile = 128
        while tile * 2 <= req:
            tile *= 2                       # keep the pow2-of-128 invariant
    num_tiles = pl.cdiv(hw, tile)
    masked = (hw % tile) != 0

    kernel = functools.partial(
        _dice_focal_kernel,
        num_classes=c, hw=hw, tile=tile,
        gamma=float(gamma),
        alpha=None if alpha is None else float(alpha),
        masked=masked,
    )

    inter, zsum, ysum, fsum = pl.pallas_call(
        kernel,
        out_shape=(
            jax.ShapeDtypeStruct((b, c, _ACC_LANES), jnp.float32),  # sum p*onehot
            jax.ShapeDtypeStruct((b, c, _ACC_LANES), jnp.float32),  # sum p^2
            jax.ShapeDtypeStruct((b, c, _ACC_LANES), jnp.float32),  # sum onehot
            jax.ShapeDtypeStruct((b, 1, _ACC_LANES), jnp.float32),  # sum focal
        ),
        grid=(b, num_tiles),
        in_specs=[
            # TODO(synk): for C < 8 a further VPU/EUP win is available by
            # repacking classes off the sublane axis ((C, S, 128) blocks);
            # kept on the simple (C, tile) layout for robustness.
            pl.BlockSpec((None, c, tile), lambda bi, ti: (bi, 0, ti)),
            pl.BlockSpec((None, 1, tile), lambda bi, ti: (bi, 0, ti)),
        ],
        out_specs=(
            pl.BlockSpec((None, c, _ACC_LANES), lambda bi, ti: (bi, 0, 0)),
            pl.BlockSpec((None, c, _ACC_LANES), lambda bi, ti: (bi, 0, 0)),
            pl.BlockSpec((None, c, _ACC_LANES), lambda bi, ti: (bi, 0, 0)),
            pl.BlockSpec((None, 1, _ACC_LANES), lambda bi, ti: (bi, 0, 0)),
        ),
        compiler_params=pltpu.CompilerParams(
            # batch axis parallel (megacore on v7x; neutral on v5e/v6e),
            # pixel-tile (reduction) axis arbitrary.
            dimension_semantics=("parallel", "arbitrary"),
            vmem_limit_bytes=int(vmem_cap * 3 // 4),
        ),
    )(x, t)

    # Tiny final combine in plain JAX: one cross-lane / cross-batch reduce over
    # the (B, C, 128) partials, then the dice ratio and focal mean.
    inter = jnp.sum(inter, axis=(0, 2))                      # (C,)
    zsum = jnp.sum(zsum, axis=(0, 2))
    ysum = jnp.sum(ysum, axis=(0, 2))
    dice = 1.0 - (2.0 * inter + SMOOTH) / (zsum + ysum + SMOOTH)
    dice_loss = jnp.sum(dice) / float(c)
    focal_loss = jnp.sum(fsum) / float(b * hw * c)
    return fl_weight * focal_loss + dc_weight * dice_loss


def _reference_loss(logits, target_b1hw, fl_weight=1.0, dc_weight=1.0,
                    gamma=2.0, alpha=None):
    """Pure-JAX reference mirroring the PyTorch module (MONAI-style softmax
    focal loss with mean reduction + multiclass dice)."""
    b, c, h, w = logits.shape
    t = target_b1hw[:, 0].astype(jnp.int32)                   # [B, H, W]
    logits = logits.astype(jnp.float32)

    logp = jax.nn.log_softmax(logits, axis=1)                 # [B, C, H, W]
    p = jnp.exp(logp)
    oh = jax.nn.one_hot(t, c, axis=1, dtype=jnp.float32)      # [B, C, H, W]

    focal = -((1.0 - p) ** gamma) * logp * oh
    if alpha is not None:
        alpha_fac = jnp.array([1.0 - alpha] + [alpha] * (c - 1), jnp.float32)
        focal = focal * alpha_fac.reshape(1, c, 1, 1)
    fl = jnp.mean(focal)

    loss = 0.0
    for i in range(c):
        inter = jnp.sum(p[:, i] * oh[:, i])
        ysum = jnp.sum(oh[:, i] * oh[:, i])
        zsum = jnp.sum(p[:, i] * p[:, i])
        loss = loss + (1.0 - (2.0 * inter + SMOOTH) / (zsum + ysum + SMOOTH))
    dc = loss / c
    return fl * fl_weight + dc * dc_weight


if __name__ == "__main__":
    key = jax.random.PRNGKey(0)
    k1, k2, k3, k4, k5, k6 = jax.random.split(key, 6)

    # Case 1: canonical small shape -- one unmasked tile per batch image.
    B, C, H, W = 2, 4, 16, 16
    logits = jax.random.normal(k1, (B, C, H, W), dtype=jnp.float32)
    target = jax.random.randint(k2, (B, 1, H, W), 0, C, dtype=jnp.int32)
    out = dice_focal_loss(logits, target, fl_weight=1.0, dc_weight=1.0)
    out = jax.block_until_ready(out)
    ref = _reference_loss(logits, target, fl_weight=1.0, dc_weight=1.0)
    assert jnp.allclose(out, ref, rtol=2e-4, atol=1e-5), (out, ref)

    # Case 2: HW not a multiple of the tile + alpha weighting -- exercises the
    # in-kernel partial-tile masking path and multi-step accumulation.
    B2, C2, H2, W2 = 2, 3, 10, 13            # hw = 130, tile = 128 -> masked
    logits2 = 3.0 * jax.random.normal(k3, (B2, C2, H2, W2), dtype=jnp.float32)
    target2 = jax.random.randint(k4, (B2, 1, H2, W2), 0, C2, dtype=jnp.int32)
    out2 = dice_focal_loss(logits2, target2, fl_weight=0.5, dc_weight=2.0,
                           alpha=0.75, tile=128)
    out2 = jax.block_until_ready(out2)
    ref2 = _reference_loss(logits2, target2, fl_weight=0.5, dc_weight=2.0,
                           alpha=0.75)
    assert jnp.allclose(out2, ref2, rtol=2e-4, atol=1e-5), (out2, ref2)

    # Case 3: multiple unmasked tiles per batch (exact-divisor tile) --
    # exercises the lane-fold tree and the per-batch accumulator revisiting.
    B3, C3, H3, W3 = 2, 4, 32, 32            # hw = 1024, tile = 256 -> 4 steps
    logits3 = jax.random.normal(k5, (B3, C3, H3, W3), dtype=jnp.float32)
    target3 = jax.random.randint(k6, (B3, 1, H3, W3), 0, C3, dtype=jnp.int32)
    out3 = dice_focal_loss(logits3, target3, tile=256)
    out3 = jax.block_until_ready(out3)
    ref3 = _reference_loss(logits3, target3)
    assert jnp.allclose(out3, ref3, rtol=2e-4, atol=1e-5), (out3, ref3)

    print("KERNEL_OK")
</pallas_src>

<mosaic_0001>
module attributes {stable_mosaic.version = 11 : i64} {
  func.func @_dice_focal_kernel(%arg0: i32, %arg1: i32, %arg2: memref<1x4x256xf32, #tpu.memory_space<vmem>>, %arg3: memref<1x1x256xi32, #tpu.memory_space<vmem>>, %arg4: memref<1x4x128xf32, #tpu.memory_space<vmem>>, %arg5: memref<1x4x128xf32, #tpu.memory_space<vmem>>, %arg6: memref<1x4x128xf32, #tpu.memory_space<vmem>>, %arg7: memref<1x1x128xf32, #tpu.memory_space<vmem>>) attributes {dimension_semantics = [#tpu.dimension_semantics<parallel>, #tpu.dimension_semantics<arbitrary>], iteration_bounds = array<i64: 2, 1>, scalar_prefetch = 0 : i64, scratch_operands = 0 : i64, tpu.core_type = #tpu.core_type<tc>, window_params = [{transform_indices = @transform_0, window_bounds = array<i64: 1, 4, 256>}, {transform_indices = @transform_1, window_bounds = array<i64: 1, 1, 256>}, {transform_indices = @transform_2, window_bounds = array<i64: 1, 4, 128>}, {transform_indices = @transform_3, window_bounds = array<i64: 1, 4, 128>}, {transform_indices = @transform_4, window_bounds = array<i64: 1, 4, 128>}, {transform_indices = @transform_5, window_bounds = array<i64: 1, 1, 128>}]} {
    %c0_i32 = arith.constant 0 : i32
    %0 = arith.cmpi eq, %arg1, %c0_i32 : i32
    %1 = arith.extui %0 : i1 to i32
    %c0_i32_0 = arith.constant 0 : i32
    %2 = arith.cmpi ne, %1, %c0_i32_0 : i32
    scf.if %2 {
      %cst_36 = arith.constant 0.000000e+00 : f32
      %76 = vector.broadcast %cst_36 : f32 to vector<4x128xf32>
      %c0_37 = arith.constant 0 : index
      %c0_38 = arith.constant 0 : index
      %c0_39 = arith.constant 0 : index
      %77 = vector.load %arg4[%c0_37, %c0_38, %c0_39] : memref<1x4x128xf32, #tpu.memory_space<vmem>>, vector<1x4x128xf32>
      %78 = vector.shape_cast %77 : vector<1x4x128xf32> to vector<4x128xf32>
      %79 = vector.shape_cast %76 : vector<4x128xf32> to vector<1x4x128xf32>
      tpu.vector_store %arg4[%c0_37, %c0_38, %c0_39], %79 {strides = array<i32>} : memref<1x4x128xf32, #tpu.memory_space<vmem>>, vector<1x4x128xf32>,
      %cst_40 = arith.constant 0.000000e+00 : f32
      %80 = vector.broadcast %cst_40 : f32 to vector<4x128xf32>
      %c0_41 = arith.constant 0 : index
      %c0_42 = arith.constant 0 : index
      %c0_43 = arith.constant 0 : index
      %81 = vector.load %arg5[%c0_41, %c0_42, %c0_43] : memref<1x4x128xf32, #tpu.memory_space<vmem>>, vector<1x4x128xf32>
      %82 = vector.shape_cast %81 : vector<1x4x128xf32> to vector<4x128xf32>
      %83 = vector.shape_cast %80 : vector<4x128xf32> to vector<1x4x128xf32>
      tpu.vector_store %arg5[%c0_41, %c0_42, %c0_43], %83 {strides = array<i32>} : memref<1x4x128xf32, #tpu.memory_space<vmem>>, vector<1x4x128xf32>,
      %cst_44 = arith.constant 0.000000e+00 : f32
      %84 = vector.broadcast %cst_44 : f32 to vector<4x128xf32>
      %c0_45 = arith.constant 0 : index
      %c0_46 = arith.constant 0 : index
      %c0_47 = arith.constant 0 : index
      %85 = vector.load %arg6[%c0_45, %c0_46, %c0_47] : memref<1x4x128xf32, #tpu.memory_space<vmem>>, vector<1x4x128xf32>
      %86 = vector.shape_cast %85 : vector<1x4x128xf32> to vector<4x128xf32>
      %87 = vector.shape_cast %84 : vector<4x128xf32> to vector<1x4x128xf32>
      tpu.vector_store %arg6[%c0_45, %c0_46, %c0_47], %87 {strides = array<i32>} : memref<1x4x128xf32, #tpu.memory_space<vmem>>, vector<1x4x128xf32>,
      %cst_48 = arith.constant 0.000000e+00 : f32
      %88 = vector.broadcast %cst_48 : f32 to vector<1x128xf32>
      %c0_49 = arith.constant 0 : index
      %c0_50 = arith.constant 0 : index
      %c0_51 = arith.constant 0 : index
      %89 = vector.load %arg7[%c0_49, %c0_50, %c0_51] : memref<1x1x128xf32, #tpu.memory_space<vmem>>, vector<1x1x128xf32>
      %90 = vector.shape_cast %89 : vector<1x1x128xf32> to vector<1x128xf32>
      %91 = vector.shape_cast %88 : vector<1x128xf32> to vector<1x1x128xf32>
      tpu.vector_store %arg7[%c0_49, %c0_50, %c0_51], %91 {strides = array<i32>} : memref<1x1x128xf32, #tpu.memory_space<vmem>>, vector<1x1x128xf32>,
    } else {
    }
    %c0 = arith.constant 0 : index
    %c0_1 = arith.constant 0 : index
    %c0_2 = arith.constant 0 : index
    %3 = vector.load %arg2[%c0, %c0_1, %c0_2] : memref<1x4x256xf32, #tpu.memory_space<vmem>>, vector<1x4x256xf32>
    %4 = vector.shape_cast %3 : vector<1x4x256xf32> to vector<4x256xf32>
    %c0_3 = arith.constant 0 : index
    %c0_4 = arith.constant 0 : index
    %c0_5 = arith.constant 0 : index
    %5 = vector.load %arg3[%c0_3, %c0_4, %c0_5] : memref<1x1x256xi32, #tpu.memory_space<vmem>>, vector<1x1x256xi32>
    %6 = vector.shape_cast %5 : vector<1x1x256xi32> to vector<1x256xi32>
    %7 = tpu.iota {dimensions = array<i32: 0>} : vector<4x256xi32>
    %8 = vector.broadcast %6 : vector<1x256xi32> to vector<4x256xi32>
    %9 = arith.cmpi eq, %8, %7 : vector<4x256xi32>
    %10 = arith.extui %9 : vector<4x256xi1> to vector<4x256xi32>
    %11 = arith.sitofp %10 : vector<4x256xi32> to vector<4x256xf32>
    %cst = arith.constant dense<0xFF800000> : vector<256xf32>
    %12 = vector.multi_reduction <maximumf>, %4, %cst [0] : vector<4x256xf32> to vector<256xf32>
    %13 = vector.shape_cast %12 : vector<256xf32> to vector<1x256xf32>
    %14 = vector.broadcast %13 : vector<1x256xf32> to vector<4x256xf32>
    %15 = arith.subf %4, %14 : vector<4x256xf32>
    %16 = math.exp %15 : vector<4x256xf32>
    %cst_6 = arith.constant dense<0.000000e+00> : vector<256xf32>
    %17 = vector.multi_reduction <add>, %16, %cst_6 [0] : vector<4x256xf32> to vector<256xf32>
    %18 = vector.shape_cast %17 : vector<256xf32> to vector<1x256xf32>
    %19 = tpu.reciprocal %18 : vector<1x256xf32> -> vector<1x256xf32>
    %20 = vector.broadcast %19 : vector<1x256xf32> to vector<4x256xf32>
    %21 = arith.mulf %16, %20 : vector<4x256xf32>
    %22 = arith.mulf %21, %11 : vector<4x256xf32>
    %23 = arith.mulf %21, %21 : vector<4x256xf32>
    %cst_7 = arith.constant dense<0.000000e+00> : vector<256xf32>
    %24 = vector.multi_reduction <add>, %22, %cst_7 [0] : vector<4x256xf32> to vector<256xf32>
    %25 = vector.shape_cast %24 : vector<256xf32> to vector<1x256xf32>
    %26 = arith.mulf %4, %11 : vector<4x256xf32>
    %cst_8 = arith.constant dense<0.000000e+00> : vector<256xf32>
    %27 = vector.multi_reduction <add>, %26, %cst_8 [0] : vector<4x256xf32> to vector<256xf32>
    %28 = vector.shape_cast %27 : vector<256xf32> to vector<1x256xf32>
    %29 = math.log %18 : vector<1x256xf32>
    %30 = arith.addf %13, %29 : vector<1x256xf32>
    %31 = arith.subf %28, %30 : vector<1x256xf32>
    %cst_9 = arith.constant 1.000000e+00 : f32
    %32 = vector.broadcast %cst_9 : f32 to vector<1x256xf32>
    %33 = arith.subf %32, %25 : vector<1x256xf32>
    %cst_10 = arith.constant 1.000000e+00 : f32
    %34 = vector.broadcast %cst_10 : f32 to vector<1x256xf32>
    %35 = arith.subf %34, %25 : vector<1x256xf32>
    %36 = arith.mulf %33, %35 : vector<1x256xf32>
    %cst_11 = arith.constant 0.000000e+00 : f32
    %37 = vector.broadcast %cst_11 : f32 to vector<1x256xf32>
    %38 = arith.subf %37, %36 : vector<1x256xf32>
    %39 = arith.mulf %38, %31 : vector<1x256xf32>
    %c0_12 = arith.constant 0 : index
    %c0_13 = arith.constant 0 : index
    %c0_14 = arith.constant 0 : index
    %40 = vector.load %arg4[%c0_12, %c0_13, %c0_14] : memref<1x4x128xf32, #tpu.memory_space<vmem>>, vector<1x4x128xf32>
    %41 = vector.shape_cast %40 : vector<1x4x128xf32> to vector<4x128xf32>
    %42 = vector.extract_strided_slice %22 {offsets = [0, 0], sizes = [4, 128], strides = [1, 1]} : vector<4x256xf32> to vector<4x128xf32>
    %43 = vector.extract_strided_slice %22 {offsets = [0, 128], sizes = [4, 128], strides = [1, 1]} : vector<4x256xf32> to vector<4x128xf32>
    %44 = arith.addf %42, %43 : vector<4x128xf32>
    %45 = arith.addf %41, %44 : vector<4x128xf32>
    %c0_15 = arith.constant 0 : index
    %c0_16 = arith.constant 0 : index
    %c0_17 = arith.constant 0 : index
    %46 = vector.load %arg4[%c0_15, %c0_16, %c0_17] : memref<1x4x128xf32, #tpu.memory_space<vmem>>, vector<1x4x128xf32>
    %47 = vector.shape_cast %46 : vector<1x4x128xf32> to vector<4x128xf32>
    %48 = vector.shape_cast %45 : vector<4x128xf32> to vector<1x4x128xf32>
    tpu.vector_store %arg4[%c0_15, %c0_16, %c0_17], %48 {strides = array<i32>} : memref<1x4x128xf32, #tpu.memory_space<vmem>>, vector<1x4x128xf32>,
    %c0_18 = arith.constant 0 : index
    %c0_19 = arith.constant 0 : index
    %c0_20 = arith.constant 0 : index
    %49 = vector.load %arg5[%c0_18, %c0_19, %c0_20] : memref<1x4x128xf32, #tpu.memory_space<vmem>>, vector<1x4x128xf32>
    %50 = vector.shape_cast %49 : vector<1x4x128xf32> to vector<4x128xf32>
    %51 = vector.extract_strided_slice %23 {offsets = [0, 0], sizes = [4, 128], strides = [1, 1]} : vector<4x256xf32> to vector<4x128xf32>
    %52 = vector.extract_strided_slice %23 {offsets = [0, 128], sizes = [4, 128], strides = [1, 1]} : vector<4x256xf32> to vector<4x128xf32>
    %53 = arith.addf %51, %52 : vector<4x128xf32>
    %54 = arith.addf %50, %53 : vector<4x128xf32>
    %c0_21 = arith.constant 0 : index
    %c0_22 = arith.constant 0 : index
    %c0_23 = arith.constant 0 : index
    %55 = vector.load %arg5[%c0_21, %c0_22, %c0_23] : memref<1x4x128xf32, #tpu.memory_space<vmem>>, vector<1x4x128xf32>
    %56 = vector.shape_cast %55 : vector<1x4x128xf32> to vector<4x128xf32>
    %57 = vector.shape_cast %54 : vector<4x128xf32> to vector<1x4x128xf32>
    tpu.vector_store %arg5[%c0_21, %c0_22, %c0_23], %57 {strides = array<i32>} : memref<1x4x128xf32, #tpu.memory_space<vmem>>, vector<1x4x128xf32>,
    %c0_24 = arith.constant 0 : index
    %c0_25 = arith.constant 0 : index
    %c0_26 = arith.constant 0 : index
    %58 = vector.load %arg6[%c0_24, %c0_25, %c0_26] : memref<1x4x128xf32, #tpu.memory_space<vmem>>, vector<1x4x128xf32>
    %59 = vector.shape_cast %58 : vector<1x4x128xf32> to vector<4x128xf32>
    %60 = vector.extract_strided_slice %11 {offsets = [0, 0], sizes = [4, 128], strides = [1, 1]} : vector<4x256xf32> to vector<4x128xf32>
    %61 = vector.extract_strided_slice %11 {offsets = [0, 128], sizes = [4, 128], strides = [1, 1]} : vector<4x256xf32> to vector<4x128xf32>
    %62 = arith.addf %60, %61 : vector<4x128xf32>
    %63 = arith.addf %59, %62 : vector<4x128xf32>
    %c0_27 = arith.constant 0 : index
    %c0_28 = arith.constant 0 : index
    %c0_29 = arith.constant 0 : index
    %64 = vector.load %arg6[%c0_27, %c0_28, %c0_29] : memref<1x4x128xf32, #tpu.memory_space<vmem>>, vector<1x4x128xf32>
    %65 = vector.shape_cast %64 : vector<1x4x128xf32> to vector<4x128xf32>
    %66 = vector.shape_cast %63 : vector<4x128xf32> to vector<1x4x128xf32>
    tpu.vector_store %arg6[%c0_27, %c0_28, %c0_29], %66 {strides = array<i32>} : memref<1x4x128xf32, #tpu.memory_space<vmem>>, vector<1x4x128xf32>,
    %c0_30 = arith.constant 0 : index
    %c0_31 = arith.constant 0 : index
    %c0_32 = arith.constant 0 : index
    %67 = vector.load %arg7[%c0_30, %c0_31, %c0_32] : memref<1x1x128xf32, #tpu.memory_space<vmem>>, vector<1x1x128xf32>
    %68 = vector.shape_cast %67 : vector<1x1x128xf32> to vector<1x128xf32>
    %69 = vector.extract_strided_slice %39 {offsets = [0, 0], sizes = [1, 128], strides = [1, 1]} : vector<1x256xf32> to vector<1x128xf32>
    %70 = vector.extract_strided_slice %39 {offsets = [0, 128], sizes = [1, 128], strides = [1, 1]} : vector<1x256xf32> to vector<1x128xf32>
    %71 = arith.addf %69, %70 : vector<1x128xf32>
    %72 = arith.addf %68, %71 : vector<1x128xf32>
    %c0_33 = arith.constant 0 : index
    %c0_34 = arith.constant 0 : index
    %c0_35 = arith.constant 0 : index
    %73 = vector.load %arg7[%c0_33, %c0_34, %c0_35] : memref<1x1x128xf32, #tpu.memory_space<vmem>>, vector<1x1x128xf32>
    %74 = vector.shape_cast %73 : vector<1x1x128xf32> to vector<1x128xf32>
    %75 = vector.shape_cast %72 : vector<1x128xf32> to vector<1x1x128xf32>
    tpu.vector_store %arg7[%c0_33, %c0_34, %c0_35], %75 {strides = array<i32>} : memref<1x1x128xf32, #tpu.memory_space<vmem>>, vector<1x1x128xf32>,
    return
  }
  func.func @transform_0(%arg0: i32, %arg1: i32) -> (i32, i32, i32) {
    %c0_i32 = arith.constant 0 : i32
    %c0_i32_0 = arith.constant 0 : i32
    return %arg0, %c0_i32, %arg1 : i32, i32, i32
  }
  func.func @transform_1(%arg0: i32, %arg1: i32) -> (i32, i32, i32) {
    %c0_i32 = arith.constant 0 : i32
    %c0_i32_0 = arith.constant 0 : i32
    return %arg0, %c0_i32, %arg1 : i32, i32, i32
  }
  func.func @transform_2(%arg0: i32, %arg1: i32) -> (i32, i32, i32) {
    %c0_i32 = arith.constant 0 : i32
    %c0_i32_0 = arith.constant 0 : i32
    %c0_i32_1 = arith.constant 0 : i32
    return %arg0, %c0_i32, %c0_i32_0 : i32, i32, i32
  }
  func.func @transform_3(%arg0: i32, %arg1: i32) -> (i32, i32, i32) {
    %c0_i32 = arith.constant 0 : i32
    %c0_i32_0 = arith.constant 0 : i32
    %c0_i32_1 = arith.constant 0 : i32
    return %arg0, %c0_i32, %c0_i32_0 : i32, i32, i32
  }
  func.func @transform_4(%arg0: i32, %arg1: i32) -> (i32, i32, i32) {
    %c0_i32 = arith.constant 0 : i32
    %c0_i32_0 = arith.constant 0 : i32
    %c0_i32_1 = arith.constant 0 : i32
    return %arg0, %c0_i32, %c0_i32_0 : i32, i32, i32
  }
  func.func @transform_5(%arg0: i32, %arg1: i32) -> (i32, i32, i32) {
    %c0_i32 = arith.constant 0 : i32
    %c0_i32_0 = arith.constant 0 : i32
    %c0_i32_1 = arith.constant 0 : i32
    return %arg0, %c0_i32, %c0_i32_0 : i32, i32, i32
  }
}

</mosaic_0001>

<llo_original>
// kernel: tpu_custom_call.1
$region0: #{tpu_custom_call.1}
  #allocation0 [shape = 'u32[]', space=smem, size = 0x4, offset = 0x4, fixed_abs, tag = 'smem constant byte address 0x4 - core index']
  #allocation1 [shape = 'u32[144,128]{1,0:T(1,128)}', space=vmem, size = 0x12000, scoped, tag = 'internal scratch']
  %s0 = inlined_call_operand.hbm [shape: f32[2,4,256], index: 0, kind: input, shape index: {}]
  %s1 = inlined_call_operand.hbm [shape: s32[2,1,256], index: 1, kind: input, shape index: {}]
  %s2 = inlined_call_operand.hbm [shape: f32[2,4,128], index: 2, kind: output, shape index: {0}]
  %s3 = inlined_call_operand.hbm [shape: f32[2,4,128], index: 3, kind: output, shape index: {1}]
  %s4 = inlined_call_operand.hbm [shape: f32[2,4,128], index: 4, kind: output, shape index: {2}]
  %s5 = inlined_call_operand.hbm [shape: f32[2,1,128], index: 5, kind: output, shape index: {3}]
  %6 = xla_tuple %s2, %s3, %s4, %s5
  %s7 = sld [smem:[#allocation0]]
  $region77: #{tpu_custom_call.1} parent=0
    _
  %s9 = ssub.s32 1, %s7
  %s10 = scalar_select 0, %s9, %s7
  $region1: #{tpu_custom_call.1} parent=0
    #allocation2 [shape = 'u8[8192]{0}', space=vmem, size = 0x2000, scoped, tag = 'input window, operand 0']
    #allocation3 [shape = 's32[2]{0}', space=sflag, size = 0x8, scoped, tag = 'scoped memory for tpu_custom_call.1']
    #allocation4 [shape = 's32[2]{0}', space=sflag, size = 0x8, scoped, tag = 'scoped memory for tpu_custom_call.1']
    #allocation5 [shape = 'u8[2048]{0}', space=vmem, size = 0x800, scoped, tag = 'input window, operand 1']
    #allocation6 [shape = 's32[2]{0}', space=sflag, size = 0x8, scoped, tag = 'scoped memory for tpu_custom_call.1']
    #allocation7 [shape = 'u8[4096]{0}', space=vmem, size = 0x1000, scoped, tag = 'output window, operand 0']
    #allocation8 [shape = 'u8[4096]{0}', space=vmem, size = 0x1000, scoped, tag = 'output window, operand 1']
    #allocation9 [shape = 's32[2]{0}', space=sflag, size = 0x8, scoped, tag = 'scoped memory for tpu_custom_call.1']
    #allocation10 [shape = 'u8[4096]{0}', space=vmem, size = 0x1000, scoped, tag = 'output window, operand 2']
    #allocation11 [shape = 'u8[1024]{0}', space=vmem, size = 0x400, scoped, tag = 'output window, operand 3']
    #allocation12 [shape = 's32[2]{0}', space=sflag, size = 0x8, scoped, tag = 'scoped memory for tpu_custom_call.1']
    %11 = vsyncpa [#allocation3], 0
    %s12 = scalar_lea.sflag [#allocation3], 1
    %13 = vsyncpa %s12, 0
    %14 = vsyncpa [#allocation6], 0
    %s15 = scalar_lea.sflag [#allocation6], 1
    %16 = vsyncpa %s15, 0
    %17 = vsyncpa [#allocation4], 0
    %s18 = scalar_lea.sflag [#allocation4], 1
    %19 = vsyncpa %s18, 0
    %20 = vsyncpa [#allocation9], 0
    %s21 = scalar_lea.sflag [#allocation9], 1
    %22 = vsyncpa %s21, 0
    %23 = vsyncpa [#allocation12], 0
    %s24 = scalar_lea.sflag [#allocation12], 1
    %25 = vsyncpa %s24, 0
    loop: start=0, step=1, limit=4
    $region2: #{tpu_custom_call.1} parent=1 // loop_pre_header
      _
    $region3: #{tpu_custom_call.1} parent=1 // loop_header
      %s27 = sphi 0, %s31
      %p28 = scmp.ge.s32.totalorder %s27, 4
      %s34 = sphi 0, %s46
      %s35 = sphi 0, %s42
      %s36 = sphi 0, %s34
      %s37 = sphi 0, %s35
      %s38 = sphi 0, %s36
      %s39 = sphi 0, %s37
      %s51 = sphi 0, %s53
      %s54 = sphi 0, %s51
      %s55 = sphi 0, %s54
      %s71 = sphi 0, %s55
      %s79 = sphi 0, %s81
      %s82 = sphi 0, %s79
      %s83 = sphi 0, %s82
      %s99 = sphi 0, %s83
      %s105 = sphi 0, %s107
      %s108 = sphi 0, %s105
      %s109 = sphi 0, %s108
      %s125 = sphi 0, %s109
      %s131 = sphi 0, %s133
      %s134 = sphi 0, %s131
      %s135 = sphi 0, %s134
      %s151 = sphi 0, %s135
      %s157 = sphi 0, %s159
      %s160 = sphi 0, %s157
      %s161 = sphi 0, %s160
      %s177 = sphi 0, %s161
      %s183 = sphi 0, %s185
      %s186 = sphi 0, %s183
      %s187 = sphi 0, %s186
      %s203 = sphi 0, %s187
    $region4: #{tpu_custom_call.1} parent=1 // loop_header_branch
      %30 = sbr.rel (%p28) target = $region8
    $region5: #{tpu_custom_call.1} parent=1 // loop_body
      %s32 = ssub.s32 %s27, 1
      %s33 = ssub.s32 %s27, 2
      %s40 = sadd.s32 1, %s35
      %p41 = scmp.ge.s32.totalorder %s40, 1
      %s42 = scalar_select %p41, 0, %s40
      %s43 = sadd.s32 1, %s34
      %s44 = scalar_select %p41, %s43, %s34
      %p45 = scmp.ge.s32.totalorder %s44, 2
      %s46 = scalar_select %p45, 0, %s44
      %s47 = ssub.s32 %s34, %s46
      %s48 = ssub.s32 %s35, %s42
      %s49 = sor.u32 %s47, %s48
      %p50 = scmp.eq.s32.totalorder %s49, 0
      %s52 = sadd.s32 %s51, 1
      %s53 = scalar_select %p50, %s51, %s52
      %p56 = pneg %p50
      %p57 = scmp.eq.s32.totalorder %s27, 1
      %p58 = por %p56, %p57
      %p59 = scmp.ne.s32.totalorder %s51, %s54
      %p60 = scmp.eq.s32.totalorder %s27, 0
      %p61 = por %p59, %p60
      %p62 = scmp.ne.s32.totalorder %s51, %s54
      %p63 = scmp.eq.s32.totalorder %s32, 1
      %p64 = por %p62, %p63
      %p65 = scmp.ne.s32.totalorder %s54, %s55
      %p66 = scmp.eq.s32.totalorder %s32, 0
      %p67 = por %p65, %p66
      %p68 = scmp.ne.s32.totalorder %s54, %s55
      %p69 = scmp.eq.s32.totalorder %s33, 1
      %p70 = por %p68, %p69
      %p72 = scmp.ne.s32.totalorder %s55, %s71
      %p73 = scmp.eq.s32.totalorder %s33, 0
      %p74 = por %p72, %p73
      %s75 = ssub.s32 %s34, %s46
      %s76 = ssub.s32 %s35, %s42
      %s77 = sor.u32 %s75, %s76
      %p78 = scmp.eq.s32.totalorder %s77, 0
      %s80 = sadd.s32 %s79, 1
      %s81 = scalar_select %p78, %s79, %s80
      %p84 = pneg %p78
      %p85 = scmp.eq.s32.totalorder %s27, 1
      %p86 = por %p84, %p85
      %p87 = scmp.ne.s32.totalorder %s79, %s82
      %p88 = scmp.eq.s32.totalorder %s27, 0
      %p89 = por %p87, %p88
      %p90 = scmp.ne.s32.totalorder %s79, %s82
      %p91 = scmp.eq.s32.totalorder %s32, 1
      %p92 = por %p90, %p91
      %p93 = scmp.ne.s32.totalorder %s82, %s83
      %p94 = scmp.eq.s32.totalorder %s32, 0
      %p95 = por %p93, %p94
      %p96 = scmp.ne.s32.totalorder %s82, %s83
      %p97 = scmp.eq.s32.totalorder %s33, 1
      %p98 = por %p96, %p97
      %p100 = scmp.ne.s32.totalorder %s83, %s99
      %p101 = scmp.eq.s32.totalorder %s33, 0
      %p102 = por %p100, %p101
      %s103 = ssub.s32 %s34, %s46
      %p104 = scmp.eq.s32.totalorder %s103, 0
      %s106 = sadd.s32 %s105, 1
      %s107 = scalar_select %p104, %s105, %s106
      %p110 = pneg %p104
      %p111 = scmp.eq.s32.totalorder %s27, 1
      %p112 = por %p110, %p111
      %p113 = scmp.ne.s32.totalorder %s105, %s108
      %p114 = scmp.eq.s32.totalorder %s27, 0
      %p115 = por %p113, %p114
      %p116 = scmp.ne.s32.totalorder %s105, %s108
      %p117 = scmp.eq.s32.totalorder %s32, 1
      %p118 = por %p116, %p117
      %p119 = scmp.ne.s32.totalorder %s108, %s109
      %p120 = scmp.eq.s32.totalorder %s32, 0
      %p121 = por %p119, %p120
      %p122 = scmp.ne.s32.totalorder %s108, %s109
      %p123 = scmp.eq.s32.totalorder %s33, 1
      %p124 = por %p122, %p123
      %p126 = scmp.ne.s32.totalorder %s109, %s125
      %p127 = scmp.eq.s32.totalorder %s33, 0
      %p128 = por %p126, %p127
      %s129 = ssub.s32 %s34, %s46
      %p130 = scmp.eq.s32.totalorder %s129, 0
      %s132 = sadd.s32 %s131, 1
      %s133 = scalar_select %p130, %s131, %s132
      %p136 = pneg %p130
      %p137 = scmp.eq.s32.totalorder %s27, 1
      %p138 = por %p136, %p137
      %p139 = scmp.ne.s32.totalorder %s131, %s134
      %p140 = scmp.eq.s32.totalorder %s27, 0
      %p141 = por %p139, %p140
      %p142 = scmp.ne.s32.totalorder %s131, %s134
      %p143 = scmp.eq.s32.totalorder %s32, 1
      %p144 = por %p142, %p143
      %p145 = scmp.ne.s32.totalorder %s134, %s135
      %p146 = scmp.eq.s32.totalorder %s32, 0
      %p147 = por %p145, %p146
      %p148 = scmp.ne.s32.totalorder %s134, %s135
      %p149 = scmp.eq.s32.totalorder %s33, 1
      %p150 = por %p148, %p149
      %p152 = scmp.ne.s32.totalorder %s135, %s151
      %p153 = scmp.eq.s32.totalorder %s33, 0
      %p154 = por %p152, %p153
      %s155 = ssub.s32 %s34, %s46
      %p156 = scmp.eq.s32.totalorder %s155, 0
      %s158 = sadd.s32 %s157, 1
      %s159 = scalar_select %p156, %s157, %s158
      %p162 = pneg %p156
      %p163 = scmp.eq.s32.totalorder %s27, 1
      %p164 = por %p162, %p163
      %p165 = scmp.ne.s32.totalorder %s157, %s160
      %p166 = scmp.eq.s32.totalorder %s27, 0
      %p167 = por %p165, %p166
      %p168 = scmp.ne.s32.totalorder %s157, %s160
      %p169 = scmp.eq.s32.totalorder %s32, 1
      %p170 = por %p168, %p169
      %p171 = scmp.ne.s32.totalorder %s160, %s161
      %p172 = scmp.eq.s32.totalorder %s32, 0
      %p173 = por %p171, %p172
      %p174 = scmp.ne.s32.totalorder %s160, %s161
      %p175 = scmp.eq.s32.totalorder %s33, 1
      %p176 = por %p174, %p175
      %p178 = scmp.ne.s32.totalorder %s161, %s177
      %p179 = scmp.eq.s32.totalorder %s33, 0
      %p180 = por %p178, %p179
      %s181 = ssub.s32 %s34, %s46
      %p182 = scmp.eq.s32.totalorder %s181, 0
      %s184 = sadd.s32 %s183, 1
      %s185 = scalar_select %p182, %s183, %s184
      %p188 = pneg %p182
      %p189 = scmp.eq.s32.totalorder %s27, 1
      %p190 = por %p188, %p189
      %p191 = scmp.ne.s32.totalorder %s183, %s186
      %p192 = scmp.eq.s32.totalorder %s27, 0
      %p193 = por %p191, %p192
      %p194 = scmp.ne.s32.totalorder %s183, %s186
      %p195 = scmp.eq.s32.totalorder %s32, 1
      %p196 = por %p194, %p195
      %p197 = scmp.ne.s32.totalorder %s186, %s187
      %p198 = scmp.eq.s32.totalorder %s32, 0
      %p199 = por %p197, %p198
      %p200 = scmp.ne.s32.totalorder %s186, %s187
      %p201 = scmp.eq.s32.totalorder %s33, 1
      %p202 = por %p200, %p201
      %p204 = scmp.ne.s32.totalorder %s187, %s203
      %p205 = scmp.eq.s32.totalorder %s33, 0
      %p206 = por %p204, %p205
      %p207 = scmp.le.s32.totalorder 1, %s27
      %p208 = scmp.lt.s32.totalorder %s27, 3
      %p209 = pnand %p207, %p208
      %p210 = pneg %p209
      // Predicated region
      $region9: #{tpu_custom_call.1} parent=5 // pred_check
        _
      $region10: #{tpu_custom_call.1} parent=5 // pred_check_branch
        %212 = sbr.rel (%p209) target = $region12
      $region11: #{tpu_custom_call.1} parent=5 // pred_region
        %s213 = ssub.s32 %s27, 1
      $region12: #{tpu_custom_call.1} parent=5 // pred_fallthru
        _
      %p214 = scmp.lt.s32.totalorder %s27, 2
      // Predicated region
      $region13: #{tpu_custom_call.1} parent=5 // pred_check
        %p215 = pneg %p214
      $region14: #{tpu_custom_call.1} parent=5 // pred_check_branch
        %217 = sbr.rel (%p215) target = $region16
      $region15: #{tpu_custom_call.1} parent=5 // pred_region
        // Predicated region
        $region17: #{tpu_custom_call.1} parent=15 // pred_check
          %p218 = pneg %p61
        $region18: #{tpu_custom_call.1} parent=15 // pred_check_branch
          %220 = sbr.rel (%p218) target = $region20
        $region19: #{tpu_custom_call.1} parent=15 // pred_region
          %s221 = sand.u32 %s51, 1
          %s222 = scalar_lea.sflag [#allocation3], %s221
          %s223 = sand.u32 %s51, 1
          %s224 = smul.addr %s223, 8
          %s225 = scalar_lea.vmem [#allocation2], %s224
          %s226 = smul.u32 2, %s35
          %s228 = ssub.s32 128, 128
          %229 = vsyncadd %s222, %s228
          %s230 = smul.addr %s34, 2
          %s231 = sadd.s32 %s226, %s230
          %s232 = smul.addr %s231, 64
          %s233 = scalar_lea.hbm %s0, %s232
          %s235 = sshll.u32 %s225, 4
          %s236 = int_to_ptr.vmem [resolvable:$true] %s235
          %238 = dma.hbm_to_vmem [thread:$0]  %s233, 128, %s236, %s222
        $region20: #{tpu_custom_call.1} parent=15 // pred_fallthru
          _
        // Predicated region
        $region21: #{tpu_custom_call.1} parent=15 // pred_check
          %p239 = pneg %p89
        $region22: #{tpu_custom_call.1} parent=15 // pred_check_branch
          %241 = sbr.rel (%p239) target = $region24
        $region23: #{tpu_custom_call.1} parent=15 // pred_region
          %s242 = sand.u32 %s79, 1
          %s243 = scalar_lea.sflag [#allocation6], %s242
          %s244 = sand.u32 %s79, 1
          %s245 = smul.addr %s244, 2
          %s246 = scalar_lea.vmem [#allocation5], %s245
          %s247 = smul.u32 2, %s35
          %s249 = ssub.s32 32, 32
          %250 = vsyncadd %s243, %s249
          %s251 = smul.addr %s34, 2
          %s252 = sadd.s32 %s247, %s251
          %s253 = smul.addr %s252, 16
          %s254 = scalar_lea.hbm %s1, %s253
          %s256 = sshll.u32 %s246, 4
          %s257 = int_to_ptr.vmem [resolvable:$true] %s256
          %259 = dma.hbm_to_vmem [thread:$0]  %s254, 32, %s257, %s243
        $region24: #{tpu_custom_call.1} parent=15 // pred_fallthru
          _
      $region16: #{tpu_custom_call.1} parent=5 // pred_fallthru
        _
      %p260 = scmp.le.s32.totalorder 1, %s27
      %p261 = scmp.lt.s32.totalorder %s27, 3
      %p262 = pnand %p260, %p261
      %p263 = pneg %p262
      // Predicated region
      $region25: #{tpu_custom_call.1} parent=5 // pred_check
        _
      $region26: #{tpu_custom_call.1} parent=5 // pred_check_branch
        %265 = sbr.rel (%p262) target = $region28
      $region27: #{tpu_custom_call.1} parent=5 // pred_region
        %s266 = ssub.s32 %s27, 1
        %s267 = sand.u32 %s54, 1
        %s268 = scalar_lea.sflag [#allocation3], %s267
        %s269 = sand.u32 %s54, 1
        %s270 = smul.addr %s269, 8
        %s271 = scalar_lea.vmem [#allocation2], %s270
        // Predicated region
        $region29: #{tpu_custom_call.1} parent=27 // pred_check
          %p272 = pneg %p67
        $region30: #{tpu_custom_call.1} parent=27 // pred_check_branch
          %274 = sbr.rel (%p272) target = $region32
        $region31: #{tpu_custom_call.1} parent=27 // pred_region
          %275 = dma.done %s268, 128
        $region32: #{tpu_custom_call.1} parent=27 // pred_fallthru
          _
        %s276 = sand.u32 %s82, 1
        %s277 = scalar_lea.sflag [#allocation6], %s276
        %s278 = sand.u32 %s82, 1
        %s279 = smul.addr %s278, 2
        %s280 = scalar_lea.vmem [#allocation5], %s279
        // Predicated region
        $region33: #{tpu_custom_call.1} parent=27 // pred_check
          %p281 = pneg %p95
        $region34: #{tpu_custom_call.1} parent=27 // pred_check_branch
          %283 = sbr.rel (%p281) target = $region36
        $region35: #{tpu_custom_call.1} parent=27 // pred_region
          %284 = dma.done %s277, 32
        $region36: #{tpu_custom_call.1} parent=27 // pred_fallthru
          _
        %s285 = sand.u32 %s54, 1
        %s286 = scalar_lea.sflag [#allocation3], %s285
        %s287 = sand.u32 %s54, 1
        %s288 = smul.addr %s287, 8
        %s289 = scalar_lea.vmem [#allocation2], %s288
        %p290 = pneg %p67
        %p291 = pneg %p64
        %s292 = sand.u32 %s82, 1
        %s293 = scalar_lea.sflag [#allocation6], %s292
        %s294 = sand.u32 %s82, 1
        %s295 = smul.addr %s294, 2
        %s296 = scalar_lea.vmem [#allocation5], %s295
        %p297 = pneg %p95
        %p298 = pneg %p92
        %p299 = pneg %p121
        %p300 = pneg %p118
        %s301 = sand.u32 %s108, 1
        %s302 = scalar_lea.sflag [#allocation4], %s301
        %s303 = sand.u32 %s108, 1
        %s304 = smul.addr %s303, 4
        %s305 = scalar_lea.vmem [#allocation7], %s304
        %p306 = pneg %p147
        %p307 = pneg %p144
        %s308 = sand.u32 %s32, 1
        %s309 = scalar_lea.sflag [#allocation9], %s308
        %s310 = sand.u32 %s134, 1
        %s311 = smul.addr %s310, 4
        %s312 = scalar_lea.vmem [#allocation8], %s311
        %p313 = pneg %p173
        %p314 = pneg %p170
        %s315 = sand.u32 %s32, 1
        %s316 = scalar_lea.sflag [#allocation9], %s315
        %s317 = sand.u32 %s160, 1
        %s318 = smul.addr %s317, 4
        %s319 = scalar_lea.vmem [#allocation10], %s318
        %p320 = pneg %p199
        %p321 = pneg %p196
        %s322 = sand.u32 %s186, 1
        %s323 = scalar_lea.sflag [#allocation12], %s322
        %s324 = sand.u32 %s186, 1
        %s325 = scalar_lea.vmem [#allocation11], %s324
        %s326 = smul.u32 2, %s37
        %s327 = smul.u32 2, %s37
        %p328 = scmp.eq.s32.totalorder %s37, 0
        // Predicated region
        $region37: #{tpu_custom_call.1} parent=27 // pred_check
          %p329 = pneg %p328
        $region38: #{tpu_custom_call.1} parent=27 // pred_check_branch
          %331 = sbr.rel (%p329) target = $region40
        $region39: #{tpu_custom_call.1} parent=27 // pred_region
          %332 = vst [vmem:[%s305] sm:$0xf] 0.0
          %333 = vst [vmem:[%s312] sm:$0xf] 0.0
          %334 = vst [vmem:[%s319] sm:$0xf] 0.0
          %335 = vst [vmem:[%s325] sm:$0x1] 0.0
        $region40: #{tpu_custom_call.1} parent=27 // pred_fallthru
          _
        %v336 = vld [vmem:[%s271] sm:$0xff]
        %v337 = vld [vmem:[%s280] sm:$0x3]
        %v338 = vlaneseq
        %v339 = vshrl.u32 %v338, 7
        %v340 = vlaneseq
        %v341 = vshrl.u32 %v340, 7
        %v342 = vsub.s32 0, %v341
        %v343 = vrot.slane %v337, %v342
        %v344 = vlaneseq
        %v345 = vshrl.u32 %v344, 7
        %v346 = vsub.s32 1, %v345
        %v347 = vrot.slane %v337, %v346
        %vm348 = vcmp.eq.s32.totalorder %v343, %v339
        %vm349 = vcmp.eq.s32.totalorder %v347, %v339
        %v350 = vsel %vm348, 1, 0
        %v351 = vsel %vm349, 1, 0
        %v352 = vcvt.s32.f32 %v350
        %v353 = vcvt.s32.f32 %v351
        %v355 = vcombine.high %v336, %v336
        %vm357 = vcmask 1043456
        %v358 = vsel %vm357, %v336, -inf
        %v359 = vrot.slane %v358, 4
        %v360 = vmax.f32 %v358, %v359
        %v361 = vrot.slane %v360, 2
        %v362 = vmax.f32 %v360, %v361
        %v363 = vrot.slane %v362, 1
        %v364 = vmax.f32 %v362, %v363
        %v365 = vsel %vm357, %v355, -inf
        %v366 = vrot.slane %v365, 4
        %v367 = vmax.f32 %v365, %v366
        %v368 = vrot.slane %v367, 2
        %v369 = vmax.f32 %v367, %v368
        %v370 = vrot.slane %v369, 1
        %v371 = vmax.f32 %v369, %v370
        %v374 = vcombine.low %v364, %v371
        %v376 = vsub.f32 %v336, %v374
        %v377 = vmul.f32 %v376, 1.442695
        %v378 = vpow.pop %v377
        %v380 = vcombine.high %v378, %v378
        %v382 = vsel %vm357, %v378, 0.0
        %v383 = vrot.slane %v382, 4
        %v384 = vadd.f32 %v382, %v383
        %v385 = vrot.slane %v384, 2
        %v386 = vadd.f32 %v384, %v385
        %v387 = vrot.slane %v386, 1
        %v388 = vadd.f32 %v386, %v387
        %v389 = vsel %vm357, %v380, 0.0
        %v390 = vrot.slane %v389, 4
        %v391 = vadd.f32 %v389, %v390
        %v392 = vrot.slane %v391, 2
        %v393 = vadd.f32 %v391, %v392
        %v394 = vrot.slane %v393, 1
        %v395 = vadd.f32 %v393, %v394
        %v396 = vrcp.pop %v388
        %v397 = vrcp.pop %v395
        %v400 = vcombine.low %v396, %v397
        %v402 = vmul.f32 %v378, %v400
        %v405 = vcombine.low %v352, %v353
        %v407 = vmul.f32 %v402, %v405
        %v408 = vmul.f32 %v402, %v402
        %v410 = vcombine.high %v407, %v407
        %v412 = vsel %vm357, %v407, 0.0
        %v413 = vrot.slane %v412, 4
        %v414 = vadd.f32 %v412, %v413
        %v415 = vrot.slane %v414, 2
        %v416 = vadd.f32 %v414, %v415
        %v417 = vrot.slane %v416, 1
        %v418 = vadd.f32 %v416, %v417
        %v419 = vsel %vm357, %v410, 0.0
        %v420 = vrot.slane %v419, 4
        %v421 = vadd.f32 %v419, %v420
        %v422 = vrot.slane %v421, 2
        %v423 = vadd.f32 %v421, %v422
        %v424 = vrot.slane %v423, 1
        %v425 = vadd.f32 %v423, %v424
        %v426 = vmul.f32 %v336, %v405
        %v428 = vcombine.high %v426, %v426
        %v430 = vsel %vm357, %v426, 0.0
        %v431 = vrot.slane %v430, 4
        %v432 = vadd.f32 %v430, %v431
        %v433 = vrot.slane %v432, 2
        %v434 = vadd.f32 %v432, %v433
        %v435 = vrot.slane %v434, 1
        %v436 = vadd.f32 %v434, %v435
        %v437 = vsel %vm357, %v428, 0.0
        %v438 = vrot.slane %v437, 4
        %v439 = vadd.f32 %v437, %v438
        %v440 = vrot.slane %v439, 2
        %v441 = vadd.f32 %v439, %v440
        %v442 = vrot.slane %v441, 1
        %v443 = vadd.f32 %v441, %v442
        %v444 = vlog2.pop %v388
        %v445 = vmul.f32 %v444, 0.6931472
        %v446 = vlog2.pop %v395
        %v447 = vmul.f32 %v446, 0.6931472
        %v448 = vadd.f32 %v364, %v445
        %v449 = vadd.f32 %v371, %v447
        %v450 = vsub.f32 %v436, %v448
        %v451 = vsub.f32 %v443, %v449
        %v452 = vsub.f32 1.0, %v418
        %v453 = vsub.f32 1.0, %v425
        %v454 = vmul.f32 %v452, %v452
        %v455 = vmul.f32 %v453, %v453
        %v456 = vsub.f32 0.0, %v454
        %v457 = vsub.f32 0.0, %v455
        %v458 = vmul.f32 %v456, %v450
        %v459 = vmul.f32 %v457, %v451
        %v460 = vld [vmem:[%s305] sm:$0xf]
        %v461 = vrot.slane %v407, 4
        %v463 = vadd.f32 %v407, %v461
        %v464 = vadd.f32 %v460, %v463
        %465 = vst [vmem:[%s305] sm:$0xf] %v464
        %v466 = vld [vmem:[%s312] sm:$0xf]
        %v468 = vrot.slane %v408, 4
        %v470 = vadd.f32 %v408, %v468
        %v471 = vadd.f32 %v466, %v470
        %472 = vst [vmem:[%s312] sm:$0xf] %v471
        %v473 = vld [vmem:[%s319] sm:$0xf]
        %v474 = vadd.f32 %v352, %v353
        %v475 = vadd.f32 %v473, %v474
        %476 = vst [vmem:[%s319] sm:$0xf] %v475
        %v477 = vld [vmem:[%s325] sm:$0x1]
        %v478 = vadd.f32 %v458, %v459
        %v479 = vadd.f32 %v477, %v478
        %480 = vst [vmem:[%s325] sm:$0x1] %v479
        %s481 = sand.u32 %s108, 1
        %s482 = scalar_lea.sflag [#allocation4], %s481
        %s483 = sand.u32 %s108, 1
        %s484 = smul.addr %s483, 4
        %s485 = scalar_lea.vmem [#allocation7], %s484
        %s486 = sand.u32 %s32, 1
        %s487 = scalar_lea.sflag [#allocation9], %s486
        %s488 = sand.u32 %s134, 1
        %s489 = smul.addr %s488, 4
        %s490 = scalar_lea.vmem [#allocation8], %s489
        %s491 = sand.u32 %s32, 1
        %s492 = scalar_lea.sflag [#allocation9], %s491
        %s493 = sand.u32 %s160, 1
        %s494 = smul.addr %s493, 4
        %s495 = scalar_lea.vmem [#allocation10], %s494
        %s496 = sand.u32 %s186, 1
        %s497 = scalar_lea.sflag [#allocation12], %s496
        %s498 = sand.u32 %s186, 1
        %s499 = scalar_lea.vmem [#allocation11], %s498
        // Predicated region
        $region41: #{tpu_custom_call.1} parent=27 // pred_check
          %p500 = pneg %p118
        $region42: #{tpu_custom_call.1} parent=27 // pred_check_branch
          %502 = sbr.rel (%p500) target = $region44
        $region43: #{tpu_custom_call.1} parent=27 // pred_region
          %s504 = ssub.s32 64, 64
          %505 = vsyncadd %s482, %s504
          %s506 = smul.addr %s36, 64
          %s507 = scalar_lea.hbm %s2, %s506
          %s509 = sshll.u32 %s485, 4
          %s510 = int_to_ptr.vmem [resolvable:$true] %s509
          %512 = dma.vmem_to_hbm [thread:$0]  %s510, 64, %s507, %s482
        $region44: #{tpu_custom_call.1} parent=27 // pred_fallthru
          _
        // Predicated region
        $region45: #{tpu_custom_call.1} parent=27 // pred_check
          %p513 = pneg %p144
        $region46: #{tpu_custom_call.1} parent=27 // pred_check_branch
          %515 = sbr.rel (%p513) target = $region48
        $region47: #{tpu_custom_call.1} parent=27 // pred_region
          %s517 = ssub.s32 64, 64
          %518 = vsyncadd %s487, %s517
          %s519 = smul.addr %s36, 64
          %s520 = scalar_lea.hbm %s3, %s519
          %s522 = sshll.u32 %s490, 4
          %s523 = int_to_ptr.vmem [resolvable:$true] %s522
          %525 = dma.vmem_to_hbm [thread:$0]  %s523, 64, %s520, %s487
        $region48: #{tpu_custom_call.1} parent=27 // pred_fallthru
          _
        // Predicated region
        $region49: #{tpu_custom_call.1} parent=27 // pred_check
          %p526 = pneg %p170
        $region50: #{tpu_custom_call.1} parent=27 // pred_check_branch
          %528 = sbr.rel (%p526) target = $region52
        $region51: #{tpu_custom_call.1} parent=27 // pred_region
          %s530 = ssub.s32 64, 64
          %531 = vsyncadd %s492, %s530
          %s532 = smul.addr %s36, 64
          %s533 = scalar_lea.hbm %s4, %s532
          %s535 = sshll.u32 %s495, 4
          %s536 = int_to_ptr.vmem [resolvable:$true] %s535
          %538 = dma.vmem_to_hbm [thread:$0]  %s536, 64, %s533, %s492
        $region52: #{tpu_custom_call.1} parent=27 // pred_fallthru
          _
        // Predicated region
        $region53: #{tpu_custom_call.1} parent=27 // pred_check
          %p539 = pneg %p196
        $region54: #{tpu_custom_call.1} parent=27 // pred_check_branch
          %541 = sbr.rel (%p539) target = $region56
        $region55: #{tpu_custom_call.1} parent=27 // pred_region
          %s543 = ssub.s32 16, 16
          %544 = vsyncadd %s497, %s543
          %s545 = smul.addr %s36, 16
          %s546 = scalar_lea.hbm %s5, %s545
          %s548 = sshll.u32 %s499, 4
          %s549 = int_to_ptr.vmem [resolvable:$true] %s548
          %551 = dma.vmem_to_hbm [thread:$0]  %s549, 16, %s546, %s497
        $region56: #{tpu_custom_call.1} parent=27 // pred_fallthru
          _
      $region28: #{tpu_custom_call.1} parent=5 // pred_fallthru
        _
      %p552 = scmp.le.s32.totalorder 2, %s27
      // Predicated region
      $region57: #{tpu_custom_call.1} parent=5 // pred_check
        %p553 = pneg %p552
      $region58: #{tpu_custom_call.1} parent=5 // pred_check_branch
        %555 = sbr.rel (%p553) target = $region60
      $region59: #{tpu_custom_call.1} parent=5 // pred_region
        %s556 = ssub.s32 %s27, 2
        // Predicated region
        $region61: #{tpu_custom_call.1} parent=59 // pred_check
          %p557 = pneg %p124
        $region62: #{tpu_custom_call.1} parent=59 // pred_check_branch
          %559 = sbr.rel (%p557) target = $region64
        $region63: #{tpu_custom_call.1} parent=59 // pred_region
          %s560 = sand.u32 %s109, 1
          %s561 = scalar_lea.sflag [#allocation4], %s560
          %s562 = sand.u32 %s109, 1
          %s563 = smul.addr %s562, 4
          %s564 = scalar_lea.vmem [#allocation7], %s563
          %565 = dma.done %s561, 64
        $region64: #{tpu_custom_call.1} parent=59 // pred_fallthru
          _
        // Predicated region
        $region65: #{tpu_custom_call.1} parent=59 // pred_check
          %p566 = pneg %p150
        $region66: #{tpu_custom_call.1} parent=59 // pred_check_branch
          %568 = sbr.rel (%p566) target = $region68
        $region67: #{tpu_custom_call.1} parent=59 // pred_region
          %s569 = sand.u32 %s33, 1
          %s570 = scalar_lea.sflag [#allocation9], %s569
          %s571 = sand.u32 %s135, 1
          %s572 = smul.addr %s571, 4
          %s573 = scalar_lea.vmem [#allocation8], %s572
          %574 = dma.done %s570, 64
        $region68: #{tpu_custom_call.1} parent=59 // pred_fallthru
          _
        // Predicated region
        $region69: #{tpu_custom_call.1} parent=59 // pred_check
          %p575 = pneg %p176
        $region70: #{tpu_custom_call.1} parent=59 // pred_check_branch
          %577 = sbr.rel (%p575) target = $region72
        $region71: #{tpu_custom_call.1} parent=59 // pred_region
          %s578 = sand.u32 %s33, 1
          %s579 = scalar_lea.sflag [#allocation9], %s578
          %s580 = sand.u32 %s161, 1
          %s581 = smul.addr %s580, 4
          %s582 = scalar_lea.vmem [#allocation10], %s581
          %583 = dma.done %s579, 64
        $region72: #{tpu_custom_call.1} parent=59 // pred_fallthru
          _
        // Predicated region
        $region73: #{tpu_custom_call.1} parent=59 // pred_check
          %p584 = pneg %p202
        $region74: #{tpu_custom_call.1} parent=59 // pred_check_branch
          %586 = sbr.rel (%p584) target = $region76
        $region75: #{tpu_custom_call.1} parent=59 // pred_region
          %s587 = sand.u32 %s187, 1
          %s588 = scalar_lea.sflag [#allocation12], %s587
          %s589 = sand.u32 %s187, 1
          %s590 = scalar_lea.vmem [#allocation11], %s589
          %591 = dma.done %s588, 16
        $region76: #{tpu_custom_call.1} parent=59 // pred_fallthru
          _
      $region60: #{tpu_custom_call.1} parent=5 // pred_fallthru
        _
    $region6: #{tpu_custom_call.1} parent=1 // loop_footer
      %s31 = sadd.s32 1, %s27
    $region7: #{tpu_custom_call.1} parent=1 // loop_footer_branch
      %26 = sbr.rel target = $region3
    $region8: #{tpu_custom_call.1} parent=1 // loop_exit
      _
    %592 = vsyncpa [#allocation3], 1
    %s593 = scalar_lea.sflag [#allocation3], 1
    %594 = vsyncpa %s593, 1
    %595 = vsyncpa [#allocation6], 1
    %s596 = scalar_lea.sflag [#allocation6], 1
    %597 = vsyncpa %s596, 1
    %598 = vsyncpa [#allocation4], 1
    %s599 = scalar_lea.sflag [#allocation4], 1
    %600 = vsyncpa %s599, 1
    %601 = vsyncpa [#allocation9], 1
    %s602 = scalar_lea.sflag [#allocation9], 1
    %603 = vsyncpa %s602, 1
    %604 = vsyncpa [#allocation12], 1
    %s605 = scalar_lea.sflag [#allocation12], 1
    %606 = vsyncpa %s605, 1

</llo_original>
